<compile_context>
chip_gen: v5e
topology: v5e:2x2
jax: 0.10.0
libtpu: 0.0.40
codegen_flags: <defaults>
</compile_context>

<pallas_src>
import functools

import jax
import jax.numpy as jnp
from jax.experimental import pallas as pl
from jax.experimental.pallas import tpu as pltpu


# ---------------------------------------------------------------------------
# Helpers
# ---------------------------------------------------------------------------
def _round_up(x, m):
    return (x + m - 1) // m * m


def _vmem_limit_bytes():
    """Generation-aware scoped-VMEM cap: ~40 MiB on v7x (64 MiB physical per
    TensorCore), ~96 MiB on v5e/v6e (128 MiB)."""
    cap = 128 * 1024 * 1024
    try:
        cap = int(getattr(pltpu.get_tpu_info(), "vmem_capacity_bytes", cap))
    except Exception:
        pass
    if cap <= 64 * 1024 * 1024:
        return 40 * 1024 * 1024
    return 96 * 1024 * 1024


def _choose_hw_tiling(hw, per_col_bytes, fixed_bytes, budget_bytes, other_steps):
    """Pick (thw, hw_pad) for the flattened output-spatial (lane) axis.

    Prefers (a) a single full-extent block for small hw (no padding, no tail
    slice-copy), otherwise (b) the largest lane-dense (multiple-of-128) tile
    that fits the VMEM budget, wastes <~12% padding and yields >=4 total grid
    steps so the v7x megacore gets >=2 pipelined steps per TensorCore.
    """
    def fits(t):
        return t * per_col_bytes + fixed_bytes <= budget_bytes

    if hw <= 1024 and fits(hw):
        return hw, hw

    hw128 = _round_up(hw, 128)
    cands = [t for t in (4096, 2048, 1024, 512, 256, 128) if t <= hw128]
    if not cands:
        return hw128, hw128
    fallback = None
    for t in cands:                      # largest first
        if not fits(t):
            continue
        padded = _round_up(hw128, t)
        if padded - hw > max(hw // 8, 128):        # cap padding waste
            continue
        if (padded // t) * max(other_steps, 1) >= 4:
            return t, padded
        if fallback is None:
            fallback = (t, padded)
    if fallback is not None:
        return fallback
    return 128, _round_up(hw128, 128)


# ---------------------------------------------------------------------------
# Fused conv-as-matmul kernel:  out[co, hw] = relu?(W2[co, K] @ pt[K, hw] + b)
# (writes directly in NCHW-flattened layout)
# ---------------------------------------------------------------------------
def _conv_mm_kernel(x_ref, w_ref, b_ref, o_ref, *, relu):
    # x_ref: (1, K, thw) bf16   w_ref: (tco, K) bf16   b_ref: (tco, 1) f32
    acc = jnp.dot(w_ref[...], x_ref[0], preferred_element_type=jnp.float32)
    acc = acc + b_ref[...]                                # f32 epilogue
    if relu:
        acc = jnp.maximum(acc, 0.0)
    o_ref[0] = acc.astype(o_ref.dtype)


def _conv_matmul(pt, w2, bias, *, tco, thw, relu, out_dtype, vmem_limit):
    """pt:(n,K,HWp) bf16, w2:(Cp,K) bf16, bias:(Cp,1) f32 -> (n,Cp,HWp)."""
    n, k, hwp = pt.shape
    cp = w2.shape[0]
    return pl.pallas_call(
        functools.partial(_conv_mm_kernel, relu=relu),
        out_shape=jax.ShapeDtypeStruct((n, cp, hwp), out_dtype),
        grid_spec=pl.GridSpec(
            grid=(n, cp // tco, hwp // thw),
            in_specs=[
                pl.BlockSpec((1, k, thw), lambda b, i, j: (b, 0, j)),
                pl.BlockSpec((tco, k), lambda b, i, j: (i, 0)),
                pl.BlockSpec((tco, 1), lambda b, i, j: (i, 0)),
            ],
            out_specs=pl.BlockSpec((1, tco, thw), lambda b, i, j: (b, i, j)),
        ),
        compiler_params=pltpu.CompilerParams(
            dimension_semantics=("parallel", "parallel", "parallel"),
            vmem_limit_bytes=vmem_limit,
        ),
    )(pt, w2, bias)


# ---------------------------------------------------------------------------
# GroupNorm2D + ReLU: two HW-tiled passes (stats accumulation, then normalize)
# ---------------------------------------------------------------------------
def _gn_stats_kernel(y_ref, s_ref, q_ref, *, hw_valid, thw, need_mask):
    j = pl.program_id(1)
    x = y_ref[0].astype(jnp.float32)                      # (Cp, thw)
    if need_mask:                                         # ignore hw padding
        col = j * thw + jax.lax.broadcasted_iota(jnp.int32, x.shape, 1)
        x = jnp.where(col < hw_valid, x, 0.0)

    @pl.when(j == 0)
    def _():
        s_ref[0] = jnp.zeros_like(s_ref[0])
        q_ref[0] = jnp.zeros_like(q_ref[0])

    s_ref[0] = s_ref[0] + jnp.sum(x, axis=1, keepdims=True)
    q_ref[0] = q_ref[0] + jnp.sum(x * x, axis=1, keepdims=True)


def _gn_norm_kernel(y_ref, a_ref, b_ref, o_ref):
    x = y_ref[0].astype(jnp.float32)
    o_ref[0] = jnp.maximum(x * a_ref[0] + b_ref[0], 0.0).astype(o_ref.dtype)


def _groupnorm_relu(y, gamma, beta, *, cout, hw, thw, num_groups, eps,
                    vmem_limit):
    """y: (n, Cp, HWp) bf16 conv output (pre-ReLU) -> f32 (n, Cp, HWp)."""
    n, cp, hwp = y.shape
    assert cout % num_groups == 0
    cg = cout // num_groups
    nhw = hwp // thw

    # Pass 1: per-(sample, channel) sum / sum^2, tiled over HW.
    ssum, ssq = pl.pallas_call(
        functools.partial(_gn_stats_kernel, hw_valid=hw, thw=thw,
                          need_mask=(hwp != hw)),
        out_shape=(jax.ShapeDtypeStruct((n, cp, 1), jnp.float32),
                   jax.ShapeDtypeStruct((n, cp, 1), jnp.float32)),
        grid_spec=pl.GridSpec(
            grid=(n, nhw),
            in_specs=[pl.BlockSpec((1, cp, thw), lambda b, j: (b, 0, j))],
            out_specs=(pl.BlockSpec((1, cp, 1), lambda b, j: (b, 0, 0)),
                       pl.BlockSpec((1, cp, 1), lambda b, j: (b, 0, 0))),
        ),
        compiler_params=pltpu.CompilerParams(
            dimension_semantics=("parallel", "arbitrary"),
            vmem_limit_bytes=vmem_limit,
        ),
    )(y)

    # Tiny (n, C) group-statistics math (torch.Tensor.var() default: unbiased).
    # Note: E[x^2]-E[x]^2 in f32; acceptable for normalized-ish activations.
    cnt = float(hw * cg)
    gsum = ssum[:, :cout, 0].reshape(n, num_groups, cg).sum(-1)
    gsq = ssq[:, :cout, 0].reshape(n, num_groups, cg).sum(-1)
    mean = gsum / cnt
    var = jnp.maximum(gsq - cnt * mean * mean, 0.0) / max(cnt - 1.0, 1.0)
    rstd = jax.lax.rsqrt(var + eps)                       # (n, G)
    a = jnp.repeat(rstd, cg, axis=1) * gamma[None, :]     # per-channel scale
    bsh = beta[None, :] - jnp.repeat(mean, cg, axis=1) * a
    if cp != cout:
        a = jnp.pad(a, ((0, 0), (0, cp - cout)))
        bsh = jnp.pad(bsh, ((0, 0), (0, cp - cout)))
    a = a.reshape(n, cp, 1).astype(jnp.float32)
    bsh = bsh.reshape(n, cp, 1).astype(jnp.float32)

    # Pass 2: normalize + affine + ReLU, tiled over HW.
    return pl.pallas_call(
        _gn_norm_kernel,
        out_shape=jax.ShapeDtypeStruct((n, cp, hwp), jnp.float32),
        grid_spec=pl.GridSpec(
            grid=(n, nhw),
            in_specs=[
                pl.BlockSpec((1, cp, thw), lambda b, j: (b, 0, j)),
                pl.BlockSpec((1, cp, 1), lambda b, j: (b, 0, 0)),
                pl.BlockSpec((1, cp, 1), lambda b, j: (b, 0, 0)),
            ],
            out_specs=pl.BlockSpec((1, cp, thw), lambda b, j: (b, 0, j)),
        ),
        compiler_params=pltpu.CompilerParams(
            dimension_semantics=("parallel", "parallel"),
            vmem_limit_bytes=vmem_limit,
        ),
    )(y, a, bsh)


# ---------------------------------------------------------------------------
# DownsamplingConvBlock forward
# ---------------------------------------------------------------------------
@functools.partial(jax.jit, static_argnames=("stride", "normalization"))
def downsampling_conv_block(x_nchw, params, *, stride=2, normalization="none"):
    w = params["conv_w"]                        # (Cout, Cin, s, s)
    b = params["conv_b"]                        # (Cout,)
    s = stride
    n, cin, h, wd = x_nchw.shape
    cout = w.shape[0]
    ho, wo = (h - s) // s + 1, (wd - s) // s + 1          # pad=0, k=stride
    hw = ho * wo
    k = cin * s * s

    vmem_limit = _vmem_limit_bytes()

    # Weight matrix (Cout, K) with K in (ci, ky, kx) order: a free contiguous
    # reshape of the torch (Cout, Cin, ky, kx) weight.  Fold BN if requested.
    w2 = w.reshape(cout, k)
    bias = b
    if normalization == "batchnorm":
        # TODO(synk): inference-mode BN only (running stats folded into W/b).
        scale = params["bn_gamma"] * jax.lax.rsqrt(params["bn_var"] + 1e-5)
        w2 = w2 * scale[:, None]
        bias = (b - params["bn_mean"]) * scale + params["bn_beta"]

    # Cout (sublane) tiling: pad to 8; own grid axis when large.
    cp8 = _round_up(cout, 8)
    if cp8 <= 512:
        tco, cp = cp8, cp8
    else:
        tco = 256
        cp = _round_up(cp8, tco)

    # HW (lane) tiling: generation/VMEM-aware, padded to the tile.
    out_dtype = jnp.bfloat16 if normalization == "groupnorm" else jnp.float32
    out_isz = jnp.dtype(out_dtype).itemsize
    per_col = 2 * (k * 2) + 2 * (tco * out_isz)           # double-buffered
    if normalization == "groupnorm":
        per_col = max(per_col, 2 * (cp * 2) + 2 * (cp * 4))
    fixed = 2 * (tco * k * 2) + 8 * tco
    thw, hwp = _choose_hw_tiling(hw, per_col, fixed, vmem_limit // 2,
                                 n * (cp // tco))

    # Space-to-depth into transposed patches (n, K, hw).  Only XLA-side data
    # rearrangement; bf16 cast fused into the same producer.  The kernel then
    # writes its output directly in NCHW layout (no output-side transpose).
    xp = x_nchw[:, :, : ho * s, : wo * s]
    xp = xp.reshape(n, cin, ho, s, wo, s)
    xp = jnp.transpose(xp, (0, 1, 3, 5, 2, 4)).astype(jnp.bfloat16)
    pt = xp.reshape(n, k, hw)
    if hwp != hw:
        pt = jnp.pad(pt, ((0, 0), (0, 0), (0, hwp - hw)))

    if cp != cout:
        w2 = jnp.pad(w2, ((0, cp - cout), (0, 0)))
        bias = jnp.pad(bias, (0, cp - cout))
    w2 = w2.astype(jnp.bfloat16)
    bias2 = bias.astype(jnp.float32).reshape(cp, 1)

    fuse_relu = normalization != "groupnorm"              # GN: ReLU after norm
    y = _conv_matmul(pt, w2, bias2, tco=tco, thw=thw, relu=fuse_relu,
                     out_dtype=out_dtype, vmem_limit=vmem_limit)

    if normalization == "groupnorm":
        y = _groupnorm_relu(y, params["gn_gamma"], params["gn_beta"],
                            cout=cout, hw=hw, thw=thw, num_groups=16,
                            eps=1e-5, vmem_limit=vmem_limit)

    if cp != cout or hwp != hw:
        y = y[:, :cout, :hw]
    return y.reshape(n, cout, ho, wo).astype(jnp.float32)   # free NCHW view


# ---------------------------------------------------------------------------
# Deterministic synthetic parameters
# ---------------------------------------------------------------------------
def init_params(key, n_in, n_out, stride=2):
    ks = jax.random.split(key, 6)
    fan = n_in * stride * stride
    return dict(
        conv_w=jax.random.normal(ks[0], (n_out, n_in, stride, stride),
                                 jnp.float32) * (1.0 / fan ** 0.5),
        conv_b=0.05 * jax.random.normal(ks[1], (n_out,), jnp.float32),
        bn_gamma=1.0 + 0.1 * jax.random.normal(ks[2], (n_out,), jnp.float32),
        bn_beta=0.05 * jax.random.normal(ks[3], (n_out,), jnp.float32),
        bn_mean=0.05 * jax.random.normal(ks[4], (n_out,), jnp.float32),
        bn_var=1.0 + 0.1 * jnp.abs(jax.random.normal(ks[5], (n_out,), jnp.float32)),
        gn_gamma=jnp.ones((n_out,), jnp.float32),   # GroupNorm2D init
        gn_beta=jnp.zeros((n_out,), jnp.float32),
    )


if __name__ == "__main__":
    key = jax.random.PRNGKey(0)
    kx, kp = jax.random.split(key)
    n_in, n_out, stride = 4, 64, 2
    x = jax.random.normal(kx, (2, n_in, 16, 16), jnp.float32)   # NCHW
    params = init_params(kp, n_in, n_out, stride)

    # f32 reference conv (+ bias) shared by all variants.
    ref_conv = jax.lax.conv_general_dilated(
        x, params["conv_w"], window_strides=(stride, stride), padding="VALID",
        dimension_numbers=("NCHW", "OIHW", "NCHW"))
    ref_conv = ref_conv + params["conv_b"].reshape(1, -1, 1, 1)

    # normalization='none'  ->  Conv2d(k=2, s=2, pad=0) + ReLU
    out = downsampling_conv_block(x, params, stride=stride, normalization="none")
    out = jax.block_until_ready(out)
    assert out.shape == (2, n_out, 8, 8), out.shape
    assert bool(jnp.all(jnp.isfinite(out))) and bool(jnp.all(out >= 0.0))
    assert bool(jnp.allclose(out, jnp.maximum(ref_conv, 0.0),
                             atol=5e-2, rtol=5e-2))

    # normalization='batchnorm' (inference-mode fold)
    out_bn = jax.block_until_ready(
        downsampling_conv_block(x, params, stride=stride,
                                normalization="batchnorm"))
    scale = params["bn_gamma"] / jnp.sqrt(params["bn_var"] + 1e-5)
    ref_bn = jnp.maximum(
        (ref_conv - params["bn_mean"].reshape(1, -1, 1, 1))
        * scale.reshape(1, -1, 1, 1)
        + params["bn_beta"].reshape(1, -1, 1, 1), 0.0)
    assert out_bn.shape == (2, n_out, 8, 8)
    assert bool(jnp.all(jnp.isfinite(out_bn)))
    assert bool(jnp.allclose(out_bn, ref_bn, atol=5e-2, rtol=5e-2))

    # normalization='groupnorm' (GroupNorm2D + ReLU)
    out_gn = jax.block_until_ready(
        downsampling_conv_block(x, params, stride=stride,
                                normalization="groupnorm"))
    G = 16
    xg = ref_conv.reshape(2, G, -1)
    mean = xg.mean(-1, keepdims=True)
    var = xg.var(-1, ddof=1, keepdims=True)      # torch .var() is unbiased
    xg = (xg - mean) / jnp.sqrt(var + 1e-5)
    ref_gn = xg.reshape(ref_conv.shape) * params["gn_gamma"].reshape(1, -1, 1, 1) \
        + params["gn_beta"].reshape(1, -1, 1, 1)
    ref_gn = jnp.maximum(ref_gn, 0.0)
    assert out_gn.shape == (2, n_out, 8, 8)
    assert bool(jnp.all(jnp.isfinite(out_gn)))
    assert bool(jnp.allclose(out_gn, ref_gn, atol=5e-2, rtol=5e-2))

    print("KERNEL_OK")
</pallas_src>

<mosaic_0001>
module attributes {stable_mosaic.version = 11 : i64} {
  func.func @_conv_mm_kernel(%arg0: i32, %arg1: i32, %arg2: i32, %arg3: memref<1x16x64xbf16, #tpu.memory_space<vmem>>, %arg4: memref<64x16xbf16, #tpu.memory_space<vmem>>, %arg5: memref<64x1xf32, #tpu.memory_space<vmem>>, %arg6: memref<1x64x64xf32, #tpu.memory_space<vmem>>) attributes {dimension_semantics = [#tpu.dimension_semantics<parallel>, #tpu.dimension_semantics<parallel>, #tpu.dimension_semantics<parallel>], iteration_bounds = array<i64: 2, 1, 1>, scalar_prefetch = 0 : i64, scratch_operands = 0 : i64, tpu.core_type = #tpu.core_type<tc>, window_params = [{transform_indices = @transform_0, window_bounds = array<i64: 1, 16, 64>}, {transform_indices = @transform_1, window_bounds = array<i64: 64, 16>}, {transform_indices = @transform_2, window_bounds = array<i64: 64, 1>}, {transform_indices = @transform_3, window_bounds = array<i64: 1, 64, 64>}]} {
    %c0 = arith.constant 0 : index
    %c0_0 = arith.constant 0 : index
    %0 = vector.load %arg4[%c0, %c0_0] : memref<64x16xbf16, #tpu.memory_space<vmem>>, vector<64x16xbf16>
    %c0_1 = arith.constant 0 : index
    %c0_2 = arith.constant 0 : index
    %c0_3 = arith.constant 0 : index
    %1 = vector.load %arg3[%c0_1, %c0_2, %c0_3] : memref<1x16x64xbf16, #tpu.memory_space<vmem>>, vector<1x16x64xbf16>
    %2 = vector.shape_cast %1 : vector<1x16x64xbf16> to vector<16x64xbf16>
    %cst = arith.constant dense<0.000000e+00> : vector<64x64xf32>
    %3 = tpu.matmul %0, %2, %cst {dimension_numbers = #tpu.dot_dimension_numbers<[1], [0], [0], [1], [0, 0, 1, 1], [], []>} : vector<64x16xbf16>, vector<16x64xbf16>, vector<64x64xf32> -> vector<64x64xf32>
    %c0_4 = arith.constant 0 : index
    %c0_5 = arith.constant 0 : index
    %4 = vector.load %arg5[%c0_4, %c0_5] : memref<64x1xf32, #tpu.memory_space<vmem>>, vector<64x1xf32>
    %5 = vector.broadcast %4 : vector<64x1xf32> to vector<64x64xf32>
    %6 = arith.addf %3, %5 : vector<64x64xf32>
    %cst_6 = arith.constant 0.000000e+00 : f32
    %7 = vector.broadcast %cst_6 : f32 to vector<64x64xf32>
    %8 = arith.maximumf %6, %7 : vector<64x64xf32>
    %c0_7 = arith.constant 0 : index
    %c0_8 = arith.constant 0 : index
    %c0_9 = arith.constant 0 : index
    %9 = vector.load %arg6[%c0_7, %c0_8, %c0_9] : memref<1x64x64xf32, #tpu.memory_space<vmem>>, vector<1x64x64xf32>
    %10 = vector.shape_cast %9 : vector<1x64x64xf32> to vector<64x64xf32>
    %11 = vector.shape_cast %8 : vector<64x64xf32> to vector<1x64x64xf32>
    tpu.vector_store %arg6[%c0_7, %c0_8, %c0_9], %11 {strides = array<i32>} : memref<1x64x64xf32, #tpu.memory_space<vmem>>, vector<1x64x64xf32>,
    return
  }
  func.func @transform_0(%arg0: i32, %arg1: i32, %arg2: i32) -> (i32, i32, i32) {
    %c0_i32 = arith.constant 0 : i32
    %c0_i32_0 = arith.constant 0 : i32
    return %arg0, %c0_i32, %arg2 : i32, i32, i32
  }
  func.func @transform_1(%arg0: i32, %arg1: i32, %arg2: i32) -> (i32, i32) {
    %c0_i32 = arith.constant 0 : i32
    %c0_i32_0 = arith.constant 0 : i32
    return %arg1, %c0_i32 : i32, i32
  }
  func.func @transform_2(%arg0: i32, %arg1: i32, %arg2: i32) -> (i32, i32) {
    %c0_i32 = arith.constant 0 : i32
    %c0_i32_0 = arith.constant 0 : i32
    return %arg1, %c0_i32 : i32, i32
  }
  func.func @transform_3(%arg0: i32, %arg1: i32, %arg2: i32) -> (i32, i32, i32) {
    %c0_i32 = arith.constant 0 : i32
    return %arg0, %arg1, %arg2 : i32, i32, i32
  }
}

</mosaic_0001>

<llo_original>
// kernel: downsampling_conv_block.1
$region0: #{downsampling_conv_block.1}
  #allocation0 [shape = 'u32[]', space=smem, size = 0x4, offset = 0x4, fixed_abs, tag = 'smem constant byte address 0x4 - core index']
  #allocation1 [shape = 'u32[72,128]{1,0:T(1,128)}', space=vmem, size = 0x9000, scoped, tag = 'internal scratch']
  %s0 = inlined_call_operand.vmem [shape: bf16[2,16,64], index: 0, kind: input, shape index: {}]
  %s1 = inlined_call_operand.vmem [shape: bf16[64,16], index: 1, kind: input, shape index: {}]
  %s2 = inlined_call_operand.vmem [shape: f32[64,1], index: 2, kind: input, shape index: {}]
  %s3 = inlined_call_operand.vmem [shape: f32[2,64,64], index: 3, kind: output, shape index: {}]
  %s4 = sld [smem:[#allocation0]]
  $region45: #{downsampling_conv_block.1} parent=0
    _
  %s6 = ssub.s32 1, %s4
  %s7 = scalar_select 0, %s6, %s4
  loop: start=0, step=1, limit=4
  $region2: #{downsampling_conv_block.1} parent=0 // loop_pre_header
    _
  $region3: #{downsampling_conv_block.1} parent=0 // loop_header
    %s9 = sphi 0, %s13
    %p10 = scmp.ge.s32.totalorder %s9, 4
    %s16 = sphi 0, %s35
    %s17 = sphi 0, %s31
    %s18 = sphi 0, %s27
    %s19 = sphi 0, %s16
    %s20 = sphi 0, %s17
    %s21 = sphi 0, %s18
    %s22 = sphi 0, %s19
    %s23 = sphi 0, %s20
    %s24 = sphi 0, %s21
    %s40 = sphi 0, %s42
    %s43 = sphi 0, %s40
    %s44 = sphi 0, %s43
    %s60 = sphi 0, %s44
    %s66 = sphi 0, %s68
    %s69 = sphi 0, %s66
    %s70 = sphi 0, %s69
    %s86 = sphi 0, %s70
    %s92 = sphi 0, %s94
    %s95 = sphi 0, %s92
    %s96 = sphi 0, %s95
    %s112 = sphi 0, %s96
    %s122 = sphi 0, %s124
    %s125 = sphi 0, %s122
    %s126 = sphi 0, %s125
    %s142 = sphi 0, %s126
  $region4: #{downsampling_conv_block.1} parent=0 // loop_header_branch
    %12 = sbr.rel (%p10) target = $region8
  $region5: #{downsampling_conv_block.1} parent=0 // loop_body
    %s14 = ssub.s32 %s9, 1
    %s15 = ssub.s32 %s9, 2
    %s25 = sadd.s32 1, %s18
    %p26 = scmp.ge.s32.totalorder %s25, 1
    %s27 = scalar_select %p26, 0, %s25
    %s28 = sadd.s32 1, %s17
    %s29 = scalar_select %p26, %s28, %s17
    %p30 = scmp.ge.s32.totalorder %s29, 1
    %s31 = scalar_select %p30, 0, %s29
    %s32 = sadd.s32 1, %s16
    %s33 = scalar_select %p30, %s32, %s16
    %p34 = scmp.ge.s32.totalorder %s33, 2
    %s35 = scalar_select %p34, 0, %s33
    %s36 = ssub.s32 %s16, %s35
    %s37 = ssub.s32 %s18, %s27
    %s38 = sor.u32 %s36, %s37
    %p39 = scmp.eq.s32.totalorder %s38, 0
    %s41 = sadd.s32 %s40, 1
    %s42 = scalar_select %p39, %s40, %s41
    %p45 = pneg %p39
    %p46 = scmp.eq.s32.totalorder %s9, 1
    %p47 = por %p45, %p46
    %p48 = scmp.ne.s32.totalorder %s40, %s43
    %p49 = scmp.eq.s32.totalorder %s9, 0
    %p50 = por %p48, %p49
    %p51 = scmp.ne.s32.totalorder %s40, %s43
    %p52 = scmp.eq.s32.totalorder %s14, 1
    %p53 = por %p51, %p52
    %p54 = scmp.ne.s32.totalorder %s43, %s44
    %p55 = scmp.eq.s32.totalorder %s14, 0
    %p56 = por %p54, %p55
    %p57 = scmp.ne.s32.totalorder %s43, %s44
    %p58 = scmp.eq.s32.totalorder %s15, 1
    %p59 = por %p57, %p58
    %p61 = scmp.ne.s32.totalorder %s44, %s60
    %p62 = scmp.eq.s32.totalorder %s15, 0
    %p63 = por %p61, %p62
    %s64 = ssub.s32 %s17, %s31
    %p65 = scmp.eq.s32.totalorder %s64, 0
    %s67 = sadd.s32 %s66, 1
    %s68 = scalar_select %p65, %s66, %s67
    %p71 = pneg %p65
    %p72 = scmp.eq.s32.totalorder %s9, 1
    %p73 = por %p71, %p72
    %p74 = scmp.ne.s32.totalorder %s66, %s69
    %p75 = scmp.eq.s32.totalorder %s9, 0
    %p76 = por %p74, %p75
    %p77 = scmp.ne.s32.totalorder %s66, %s69
    %p78 = scmp.eq.s32.totalorder %s14, 1
    %p79 = por %p77, %p78
    %p80 = scmp.ne.s32.totalorder %s69, %s70
    %p81 = scmp.eq.s32.totalorder %s14, 0
    %p82 = por %p80, %p81
    %p83 = scmp.ne.s32.totalorder %s69, %s70
    %p84 = scmp.eq.s32.totalorder %s15, 1
    %p85 = por %p83, %p84
    %p87 = scmp.ne.s32.totalorder %s70, %s86
    %p88 = scmp.eq.s32.totalorder %s15, 0
    %p89 = por %p87, %p88
    %s90 = ssub.s32 %s17, %s31
    %p91 = scmp.eq.s32.totalorder %s90, 0
    %s93 = sadd.s32 %s92, 1
    %s94 = scalar_select %p91, %s92, %s93
    %p97 = pneg %p91
    %p98 = scmp.eq.s32.totalorder %s9, 1
    %p99 = por %p97, %p98
    %p100 = scmp.ne.s32.totalorder %s92, %s95
    %p101 = scmp.eq.s32.totalorder %s9, 0
    %p102 = por %p100, %p101
    %p103 = scmp.ne.s32.totalorder %s92, %s95
    %p104 = scmp.eq.s32.totalorder %s14, 1
    %p105 = por %p103, %p104
    %p106 = scmp.ne.s32.totalorder %s95, %s96
    %p107 = scmp.eq.s32.totalorder %s14, 0
    %p108 = por %p106, %p107
    %p109 = scmp.ne.s32.totalorder %s95, %s96
    %p110 = scmp.eq.s32.totalorder %s15, 1
    %p111 = por %p109, %p110
    %p113 = scmp.ne.s32.totalorder %s96, %s112
    %p114 = scmp.eq.s32.totalorder %s15, 0
    %p115 = por %p113, %p114
    %s116 = ssub.s32 %s16, %s35
    %s117 = ssub.s32 %s17, %s31
    %s118 = sor.u32 %s116, %s117
    %s119 = ssub.s32 %s18, %s27
    %s120 = sor.u32 %s118, %s119
    %p121 = scmp.eq.s32.totalorder %s120, 0
    %s123 = sadd.s32 %s122, 1
    %s124 = scalar_select %p121, %s122, %s123
    %p127 = pneg %p121
    %p128 = scmp.eq.s32.totalorder %s9, 1
    %p129 = por %p127, %p128
    %p130 = scmp.ne.s32.totalorder %s122, %s125
    %p131 = scmp.eq.s32.totalorder %s9, 0
    %p132 = por %p130, %p131
    %p133 = scmp.ne.s32.totalorder %s122, %s125
    %p134 = scmp.eq.s32.totalorder %s14, 1
    %p135 = por %p133, %p134
    %p136 = scmp.ne.s32.totalorder %s125, %s126
    %p137 = scmp.eq.s32.totalorder %s14, 0
    %p138 = por %p136, %p137
    %p139 = scmp.ne.s32.totalorder %s125, %s126
    %p140 = scmp.eq.s32.totalorder %s15, 1
    %p141 = por %p139, %p140
    %p143 = scmp.ne.s32.totalorder %s126, %s142
    %p144 = scmp.eq.s32.totalorder %s15, 0
    %p145 = por %p143, %p144
    %p146 = scmp.le.s32.totalorder 1, %s9
    %p147 = scmp.lt.s32.totalorder %s9, 3
    %p148 = pnand %p146, %p147
    %p149 = pneg %p148
    // Predicated region
    $region9: #{downsampling_conv_block.1} parent=5 // pred_check
      _
    $region10: #{downsampling_conv_block.1} parent=5 // pred_check_branch
      %151 = sbr.rel (%p148) target = $region12
    $region11: #{downsampling_conv_block.1} parent=5 // pred_region
      %s152 = ssub.s32 %s9, 1
      // Predicated region
      $region13: #{downsampling_conv_block.1} parent=11 // pred_check
        %p153 = pneg %p82
      $region14: #{downsampling_conv_block.1} parent=11 // pred_check_branch
        %155 = sbr.rel (%p153) target = $region16
      $region15: #{downsampling_conv_block.1} parent=11 // pred_region
        %s156 = smul.u32 8, %s20
        %p157 = scmp.lt.s32.totalorder %s156, 7
        %s158 = scalar_select %p157, %s156, 7
        %s159 = smul.addr %s158, 4
        %s160 = scalar_lea.vmem %s1, %s159
        %s161 = smul.u32 8, %s20
      $region16: #{downsampling_conv_block.1} parent=11 // pred_fallthru
        _
      // Predicated region
      $region17: #{downsampling_conv_block.1} parent=11 // pred_check
        %p162 = pneg %p108
      $region18: #{downsampling_conv_block.1} parent=11 // pred_check_branch
        %164 = sbr.rel (%p162) target = $region20
      $region19: #{downsampling_conv_block.1} parent=11 // pred_region
        %s165 = smul.u32 8, %s20
        %p166 = scmp.lt.s32.totalorder %s165, 7
        %s167 = scalar_select %p166, %s165, 7
        %s168 = smul.addr %s167, 8
        %s169 = scalar_lea.vmem %s2, %s168
        %s170 = smul.u32 8, %s20
      $region20: #{downsampling_conv_block.1} parent=11 // pred_fallthru
        _
    $region12: #{downsampling_conv_block.1} parent=5 // pred_fallthru
      _
    %p171 = scmp.lt.s32.totalorder %s9, 2
    // Predicated region
    $region21: #{downsampling_conv_block.1} parent=5 // pred_check
      %p172 = pneg %p171
    $region22: #{downsampling_conv_block.1} parent=5 // pred_check_branch
      %174 = sbr.rel (%p172) target = $region24
    $region23: #{downsampling_conv_block.1} parent=5 // pred_region
      // Predicated region
      $region25: #{downsampling_conv_block.1} parent=23 // pred_check
        %p175 = pneg %p50
      $region26: #{downsampling_conv_block.1} parent=23 // pred_check_branch
        %177 = sbr.rel (%p175) target = $region28
      $region27: #{downsampling_conv_block.1} parent=23 // pred_region
        %p178 = scmp.lt.s32.totalorder %s16, 1
        %s179 = scalar_select %p178, %s16, 1
        %p180 = scmp.lt.s32.totalorder %s18, 0
        %s181 = scalar_select %p180, %s18, 0
        %s182 = smul.addr %s179, 2
        %s183 = sadd.s32 %s181, %s182
        %s184 = smul.addr %s183, 4
        %s185 = scalar_lea.vmem %s0, %s184
      $region28: #{downsampling_conv_block.1} parent=23 // pred_fallthru
        _
    $region24: #{downsampling_conv_block.1} parent=5 // pred_fallthru
      _
    %p186 = scmp.le.s32.totalorder 1, %s9
    %p187 = scmp.lt.s32.totalorder %s9, 3
    %p188 = pnand %p186, %p187
    %p189 = pneg %p188
    // Predicated region
    $region29: #{downsampling_conv_block.1} parent=5 // pred_check
      _
    $region30: #{downsampling_conv_block.1} parent=5 // pred_check_branch
      %191 = sbr.rel (%p188) target = $region32
    $region31: #{downsampling_conv_block.1} parent=5 // pred_region
      %s192 = ssub.s32 %s9, 1
      %p193 = scmp.lt.s32.totalorder %s19, 1
      %s194 = scalar_select %p193, %s19, 1
      %p195 = scmp.lt.s32.totalorder %s21, 0
      %s196 = scalar_select %p195, %s21, 0
      %s197 = smul.addr %s194, 2
      %s198 = sadd.s32 %s196, %s197
      %s199 = smul.addr %s198, 4
      %s200 = scalar_lea.vmem %s0, %s199
      %p201 = pneg %p56
      %p202 = pneg %p53
      %s203 = smul.u32 8, %s20
      %p204 = scmp.lt.s32.totalorder %s203, 7
      %s205 = scalar_select %p204, %s203, 7
      %s206 = smul.addr %s205, 4
      %s207 = scalar_lea.vmem %s1, %s206
      %p208 = pneg %p82
      %p209 = pneg %p79
      %s210 = smul.u32 8, %s20
      %p211 = scmp.lt.s32.totalorder %s210, 7
      %s212 = scalar_select %p211, %s210, 7
      %s213 = smul.addr %s212, 8
      %s214 = scalar_lea.vmem %s2, %s213
      %p215 = pneg %p108
      %p216 = pneg %p105
      %p217 = pneg %p138
      %p218 = pneg %p135
      %s219 = smul.u32 8, %s20
      %p220 = scmp.lt.s32.totalorder %s19, 1
      %s221 = scalar_select %p220, %s19, 1
      %p222 = scmp.lt.s32.totalorder %s219, 7
      %s223 = scalar_select %p222, %s219, 7
      %p224 = scmp.lt.s32.totalorder %s21, 0
      %s225 = scalar_select %p224, %s21, 0
      %s226 = sadd.s32 %s225, %s223
      %s227 = smul.addr %s221, 8
      %s228 = sadd.s32 %s226, %s227
      %s229 = smul.addr %s228, 8
      %s230 = scalar_lea.vmem %s3, %s229
      %p231 = scmp.lt.s32.totalorder %s19, 1
      %s232 = scalar_select %p231, %s19, 1
      %p233 = scmp.lt.s32.totalorder %s21, 0
      %s234 = scalar_select %p233, %s21, 0
      %s235 = smul.addr %s232, 2
      %s236 = sadd.s32 %s234, %s235
      %s237 = smul.addr %s236, 4
      %s238 = scalar_lea.vmem %s0, %s237
      %s239 = smul.u32 8, %s20
      %p240 = scmp.lt.s32.totalorder %s239, 7
      %s241 = scalar_select %p240, %s239, 7
      %s242 = smul.addr %s241, 4
      %s243 = scalar_lea.vmem %s1, %s242
      %s244 = smul.u32 8, %s20
      %s245 = smul.u32 8, %s20
      %p246 = scmp.lt.s32.totalorder %s245, 7
      %s247 = scalar_select %p246, %s245, 7
      %s248 = smul.addr %s247, 8
      %s249 = scalar_lea.vmem %s2, %s248
      %s250 = smul.u32 8, %s20
      %s251 = smul.u32 8, %s20
      %p252 = scmp.lt.s32.totalorder %s19, 1
      %s253 = scalar_select %p252, %s19, 1
      %p254 = scmp.lt.s32.totalorder %s251, 7
      %s255 = scalar_select %p254, %s251, 7
      %p256 = scmp.lt.s32.totalorder %s21, 0
      %s257 = scalar_select %p256, %s21, 0
      %s258 = sadd.s32 %s257, %s255
      %s259 = smul.addr %s253, 8
      %s260 = sadd.s32 %s258, %s259
      %s261 = smul.addr %s260, 8
      %s262 = scalar_lea.vmem %s3, %s261
      %s263 = smul.u32 8, %s20
      %v265 = vld [vmem:[%s243] sm:$0xf]
      %v266 = vld [vmem:[%s243 + $0x4] sm:$0xf]
      %v267 = vld [vmem:[%s243 + $0x8] sm:$0xf]
      %v268 = vld [vmem:[%s243 + $0xc] sm:$0xf]
      %v269 = vld [vmem:[%s243 + $0x10] sm:$0xf]
      %v270 = vld [vmem:[%s243 + $0x14] sm:$0xf]
      %v271 = vld [vmem:[%s243 + $0x18] sm:$0xf]
      %v272 = vld [vmem:[%s243 + $0x1c] sm:$0xf]
      %v273 = vld [vmem:[%s238] sm:$0xf]
      %v274 = vld [vmem:[%s238 + $0x4] sm:$0xf]
      %v275 = vld [vmem:[%s249] sm:$0xff]
      %v276 = vld [vmem:[%s249 + $0x8] sm:$0xff]
      %v277 = vld [vmem:[%s249 + $0x10] sm:$0xff]
      %v278 = vld [vmem:[%s249 + $0x18] sm:$0xff]
      %v279 = vld [vmem:[%s249 + $0x20] sm:$0xff]
      %v280 = vld [vmem:[%s249 + $0x28] sm:$0xff]
      %v281 = vld [vmem:[%s249 + $0x30] sm:$0xff]
      %v282 = vld [vmem:[%s249 + $0x38] sm:$0xff]
      %284 = vset.pattern.permute.xlu0 0
      %285 = vperm.xlu0 %284, %v275
      %v286 = vpop.permute.xlu0 %285
      %289 = vset.pattern.permute.xlu0 0
      %290 = vperm.xlu0 %289, %v276
      %v291 = vpop.permute.xlu0 %290
      %294 = vset.pattern.permute.xlu0 0
      %295 = vperm.xlu0 %294, %v277
      %v296 = vpop.permute.xlu0 %295
      %299 = vset.pattern.permute.xlu0 0
      %300 = vperm.xlu0 %299, %v278
      %v301 = vpop.permute.xlu0 %300
      %304 = vset.pattern.permute.xlu0 0
      %305 = vperm.xlu0 %304, %v279
      %v306 = vpop.permute.xlu0 %305
      %309 = vset.pattern.permute.xlu0 0
      %310 = vperm.xlu0 %309, %v280
      %v311 = vpop.permute.xlu0 %310
      %314 = vset.pattern.permute.xlu0 0
      %315 = vperm.xlu0 %314, %v281
      %v316 = vpop.permute.xlu0 %315
      %319 = vset.pattern.permute.xlu0 0
      %320 = vperm.xlu0 %319, %v282
      %v321 = vpop.permute.xlu0 %320
      %v331 = vunpack.c.l.b16 %v265
      %v332 = vunpack.c.l.b16 %v266
      %v333 = vunpack.c.l.b16 %v267
      %v334 = vunpack.c.l.b16 %v268
      %v335 = vunpack.c.l.b16 %v269
      %v336 = vunpack.c.l.b16 %v270
      %v337 = vunpack.c.l.b16 %v271
      %v338 = vunpack.c.l.b16 %v272
      %v339 = vpack.c.b16 %v332, %v331
      %v340 = vpack.c.b16 %v334, %v333
      %v341 = vpack.c.b16 %v336, %v335
      %v342 = vpack.c.b16 %v338, %v337
      %v345 = vunpack.c.l.b16 %v273
      %v346 = vunpack.c.l.b16 %v274
      %v347 = vpack.c.b16 %v346, %v345
      %vm349 = vcmask 130048
      %v351 = vsel %vm349, %v339, 0
      %v354 = vsel %vm349, %v340, 0
      %v357 = vsel %vm349, %v341, 0
      %v360 = vsel %vm349, %v342, 0
      %362 = vmatpush.bf16.msra.mxu0 0
      %363 = vmatpush.bf16.msra.mxu0 0
      %364 = vmatpush.bf16.msra.mxu0 0
      %365 = vmatpush.bf16.msra.mxu0 0
      %366 = vmatpush.bf16.msra.mxu0 0
      %367 = vmatpush.bf16.msra.mxu0 0
      %368 = vmatpush.bf16.msra.mxu0 0
      %369 = vmatpush.bf16.msra.mxu0 %v347
      %370 = vmatmul.bf16.gmra.mxu0 %v351
      %v371 = vpop.f32.mrf.mxu0
      %v372 = vadd.f32 %v286, %v371
      %v373 = vpop.f32.mrf.mxu0
      %v374 = vadd.f32 %v291, %v373
      %375 = vmatmul.bf16.gmra.mxu0 %v354
      %v376 = vpop.f32.mrf.mxu0
      %v377 = vadd.f32 %v296, %v376
      %v378 = vpop.f32.mrf.mxu0
      %v379 = vadd.f32 %v301, %v378
      %380 = vmatmul.bf16.gmra.mxu0 %v357
      %v381 = vpop.f32.mrf.mxu0
      %v382 = vadd.f32 %v306, %v381
      %v383 = vpop.f32.mrf.mxu0
      %v384 = vadd.f32 %v311, %v383
      %385 = vmatmul.bf16.gmra.mxu0 %v360
      %v386 = vpop.f32.mrf.mxu0
      %v387 = vadd.f32 %v316, %v386
      %v388 = vpop.f32.mrf.mxu0
      %v389 = vadd.f32 %v321, %v388
      %390 = vdwg.mxu0
      %v391 = vmax.f32 %v372, 0.0
      %v392 = vmax.f32 %v374, 0.0
      %v393 = vmax.f32 %v377, 0.0
      %v394 = vmax.f32 %v379, 0.0
      %v395 = vmax.f32 %v382, 0.0
      %v396 = vmax.f32 %v384, 0.0
      %v397 = vmax.f32 %v387, 0.0
      %v398 = vmax.f32 %v389, 0.0
      %vm399 = vcmask 523264
      %400 = vst.msk [vmem:[%s262] sm:$0xff] %vm399, %v391
      %401 = vst.msk [vmem:[%s262 + $0x8] sm:$0xff] %vm399, %v392
      %402 = vst.msk [vmem:[%s262 + $0x10] sm:$0xff] %vm399, %v393
      %403 = vst.msk [vmem:[%s262 + $0x18] sm:$0xff] %vm399, %v394
      %404 = vst.msk [vmem:[%s262 + $0x20] sm:$0xff] %vm399, %v395
      %405 = vst.msk [vmem:[%s262 + $0x28] sm:$0xff] %vm399, %v396
      %406 = vst.msk [vmem:[%s262 + $0x30] sm:$0xff] %vm399, %v397
      %407 = vst.msk [vmem:[%s262 + $0x38] sm:$0xff] %vm399, %v398
      %s408 = smul.u32 8, %s20
      %p409 = scmp.lt.s32.totalorder %s19, 1
      %s410 = scalar_select %p409, %s19, 1
      %p411 = scmp.lt.s32.totalorder %s408, 7
      %s412 = scalar_select %p411, %s408, 7
      %p413 = scmp.lt.s32.totalorder %s21, 0
      %s414 = scalar_select %p413, %s21, 0
      %s415 = sadd.s32 %s414, %s412
      %s416 = smul.addr %s410, 8
      %s417 = sadd.s32 %s415, %s416
      %s418 = smul.addr %s417, 8
      %s419 = scalar_lea.vmem %s3, %s418
      // Predicated region
      $region33: #{downsampling_conv_block.1} parent=31 // pred_check
        %p420 = pneg %p135
      $region34: #{downsampling_conv_block.1} parent=31 // pred_check_branch
        %422 = sbr.rel (%p420) target = $region36
      $region35: #{downsampling_conv_block.1} parent=31 // pred_region
        %s423 = smul.u32 8, %s20
      $region36: #{downsampling_conv_block.1} parent=31 // pred_fallthru
        _
    $region32: #{downsampling_conv_block.1} parent=5 // pred_fallthru
      _
    %p424 = scmp.le.s32.totalorder 2, %s9
    // Predicated region
    $region37: #{downsampling_conv_block.1} parent=5 // pred_check
      %p425 = pneg %p424
    $region38: #{downsampling_conv_block.1} parent=5 // pred_check_branch
      %427 = sbr.rel (%p425) target = $region40
    $region39: #{downsampling_conv_block.1} parent=5 // pred_region
      %s428 = ssub.s32 %s9, 2
      // Predicated region
      $region41: #{downsampling_conv_block.1} parent=39 // pred_check
        %p429 = pneg %p141
      $region42: #{downsampling_conv_block.1} parent=39 // pred_check_branch
        %431 = sbr.rel (%p429) target = $region44
      $region43: #{downsampling_conv_block.1} parent=39 // pred_region
        %s432 = smul.u32 8, %s23
        %p433 = scmp.lt.s32.totalorder %s22, 1
        %s434 = scalar_select %p433, %s22, 1
        %p435 = scmp.lt.s32.totalorder %s432, 7
        %s436 = scalar_select %p435, %s432, 7
        %p437 = scmp.lt.s32.totalorder %s24, 0
        %s438 = scalar_select %p437, %s24, 0
        %s439 = sadd.s32 %s438, %s436
        %s440 = smul.addr %s434, 8
        %s441 = sadd.s32 %s439, %s440
        %s442 = smul.addr %s441, 8
        %s443 = scalar_lea.vmem %s3, %s442
      $region44: #{downsampling_conv_block.1} parent=39 // pred_fallthru
        _
    $region40: #{downsampling_conv_block.1} parent=5 // pred_fallthru
      _
  $region6: #{downsampling_conv_block.1} parent=0 // loop_footer
    %s13 = sadd.s32 1, %s9
  $region7: #{downsampling_conv_block.1} parent=0 // loop_footer_branch
    %8 = sbr.rel target = $region3
  $region8: #{downsampling_conv_block.1} parent=0 // loop_exit
    _

</llo_original>
